<compile_context>
chip_gen: v7x
topology: tpu7x:2x2x1
jax: 0.10.0
libtpu: 0.0.40
codegen_flags: <defaults>
</compile_context>

<pallas_src>
import functools

import jax
import jax.numpy as jnp
from jax.experimental import pallas as pl
from jax.experimental.pallas import tpu as pltpu


def lstm_fc_kernel(x_ref, wih_ref, whh_ref, b_ref, wfc_ref, bfc_ref,
                   out_ref, xw_scr, *, seq_len, batch, hidden, input_size):
    """Single-invocation LSTM + FC head (everything resident in VMEM).

    x_ref   : (T, B, I)   time-major, batch padded to a multiple of 8
    wih_ref : (I, 4H)     W_ih^T
    whh_ref : (H, 4H)     W_hh^T
    b_ref   : (1, 4H)     b_ih + b_hh
    wfc_ref : (H, O)      W_fc^T
    bfc_ref : (1, O)      b_fc
    out_ref : (B, O)
    xw_scr  : (T, B, 4H)  VMEM scratch holding the hoisted input projection
    """
    T, B, H, I = seq_len, batch, hidden, input_size

    # ---- Phase 1: hoisted input projection for ALL timesteps at once.
    # Gate order is PyTorch's (i, f, g, o).
    if I <= 8:
        # Contraction depth I is tiny: VPU lane-broadcast multiply instead of
        # a K=I MXU matmul (no MXU push/drain round-trip in the prologue).
        x = x_ref[...]                                        # (T, B, I)
        proj = x[:, :, 0:1] * wih_ref[0:1, :]                 # (T, B, 4H)
        for i in range(1, I):
            proj = proj + x[:, :, i:i + 1] * wih_ref[i:i + 1, :]
        xw_scr[...] = proj + b_ref[...]
    else:
        x2d = x_ref[...].reshape(T * B, I)
        xw = jnp.dot(x2d, wih_ref[...], preferred_element_type=jnp.float32)
        xw_scr[...] = xw.reshape(T, B, 4 * H) + b_ref[...]

    # Loop-invariant recurrent weight, loaded once so the MXU RHS push can be
    # hoisted out of the (unrolled) loop.
    whh = whh_ref[...]                                        # (H, 4H)

    # ---- Phase 2: the serial recurrence.  Only h @ W_hh^T + gate
    # nonlinearities remain per step.
    def step(t, carry):
        h, c = carry
        gates = xw_scr[t] + jnp.dot(h, whh,
                                    preferred_element_type=jnp.float32)  # (B,4H)
        # One full-width sigmoid + one tanh on the g slice (+ one tanh on the
        # new cell) instead of 3 quarter-width sigmoids + 2 tanhs.
        sig = jax.nn.sigmoid(gates)
        i_g = sig[:, 0:H]
        f_g = sig[:, H:2 * H]
        o_g = sig[:, 3 * H:4 * H]
        g_g = jnp.tanh(gates[:, 2 * H:3 * H])
        c_new = f_g * c + i_g * g_g
        h_new = o_g * jnp.tanh(c_new)
        return h_new, c_new

    h0 = jnp.zeros((B, H), jnp.float32)
    c0 = jnp.zeros((B, H), jnp.float32)
    unroll = True if T <= 32 else 8      # partial unroll keeps LLO visibility
    h_last, _ = jax.lax.fori_loop(0, T, step, (h0, c0), unroll=unroll)

    # ---- Phase 3: fused Linear head on the last hidden state.
    out_ref[...] = (
        jnp.dot(h_last, wfc_ref[...], preferred_element_type=jnp.float32)
        + bfc_ref[...])


def _lstm_model_forward(x, params):
    """x: (B, T, I) batch_first float32 (same convention as the PyTorch module)."""
    B, T, I = x.shape
    H = params["w_hh"].shape[1]
    O = params["w_fc"].shape[0]

    # Pad batch to a full sublane group (multiple of 8); padded rows are zeros
    # and their results are discarded at the end.
    B_pad = ((B + 7) // 8) * 8

    x_tm = jnp.transpose(x, (1, 0, 2))                        # (T, B, I) time-major
    if B_pad != B:
        x_tm = jnp.pad(x_tm, ((0, 0), (0, B_pad - B), (0, 0)))

    wih_t = params["w_ih"].T                                  # (I, 4H)
    whh_t = params["w_hh"].T                                  # (H, 4H)
    b = (params["b_ih"] + params["b_hh"]).reshape(1, 4 * H)   # (1, 4H)
    wfc_t = params["w_fc"].T                                  # (H, O)
    bfc = params["b_fc"].reshape(1, O)                        # (1, O)

    kernel = functools.partial(lstm_fc_kernel, seq_len=T, batch=B_pad,
                               hidden=H, input_size=I)

    # Rough VMEM estimate (with lane/sublane padding) -> explicit limit with
    # headroom; scoped default (16/32 MiB) is well below physical VMEM.
    def _pad(n, m):
        return ((n + m - 1) // m) * m
    est_bytes = 4 * (T * B_pad * _pad(I, 128)
                     + _pad(I, 8) * 4 * H
                     + H * 4 * H
                     + 8 * 4 * H
                     + H * _pad(O, 128)
                     + 8 * _pad(O, 128)
                     + T * B_pad * 4 * H
                     + B_pad * _pad(O, 128))
    vmem_limit = int(min(64 * 1024 * 1024, max(16 * 1024 * 1024, 2 * est_bytes)))

    vspec = lambda: pl.BlockSpec(memory_space=pltpu.MemorySpace.VMEM)
    out = pl.pallas_call(
        kernel,
        out_shape=jax.ShapeDtypeStruct((B_pad, O), jnp.float32),
        in_specs=[vspec() for _ in range(6)],
        out_specs=vspec(),
        scratch_shapes=[
            pltpu.VMEM((T, B_pad, 4 * H), jnp.float32),       # hoisted x@W_ih
        ],
        compiler_params=pltpu.CompilerParams(vmem_limit_bytes=vmem_limit),
    )(x_tm, wih_t, whh_t, b, wfc_t, bfc)

    return out[:B]                                            # drop batch padding


# jit the whole wrapper so the transpose/pad/weight-prep fuses with the kernel
# dispatch instead of running as eager host-driven ops.
lstm_model_forward = jax.jit(_lstm_model_forward)


def lstm_model_reference(x, params):
    """Pure-JAX reference matching torch.nn.LSTM + Linear semantics."""
    B, T, I = x.shape
    H = params["w_hh"].shape[1]
    w_ih_t = params["w_ih"].T
    w_hh_t = params["w_hh"].T
    b = params["b_ih"] + params["b_hh"]

    def step(carry, x_t):
        h, c = carry
        gates = x_t @ w_ih_t + h @ w_hh_t + b
        i = jax.nn.sigmoid(gates[:, 0:H])
        f = jax.nn.sigmoid(gates[:, H:2 * H])
        g = jnp.tanh(gates[:, 2 * H:3 * H])
        o = jax.nn.sigmoid(gates[:, 3 * H:4 * H])
        c = f * c + i * g
        h = o * jnp.tanh(c)
        return (h, c), None

    h0 = jnp.zeros((B, H), jnp.float32)
    c0 = jnp.zeros((B, H), jnp.float32)
    (h_last, _), _ = jax.lax.scan(step, (h0, c0), jnp.transpose(x, (1, 0, 2)))
    return h_last @ params["w_fc"].T + params["b_fc"]


def init_params(key, input_size, hidden, output_size):
    """Deterministic init mimicking PyTorch's U(-1/sqrt(H), 1/sqrt(H))."""
    bound = 1.0 / jnp.sqrt(jnp.float32(hidden))
    ks = jax.random.split(key, 6)
    u = lambda k, shape: jax.random.uniform(k, shape, jnp.float32, -bound, bound)
    return {
        "w_ih": u(ks[0], (4 * hidden, input_size)),
        "w_hh": u(ks[1], (4 * hidden, hidden)),
        "b_ih": u(ks[2], (4 * hidden,)),
        "b_hh": u(ks[3], (4 * hidden,)),
        "w_fc": u(ks[4], (output_size, hidden)),
        "b_fc": u(ks[5], (output_size,)),
    }


if __name__ == "__main__":
    # Small shapes consistent with the module: batch=2, seq=8, input_size=1,
    # hidden_layer_size=32, output_size=1, num_layers=1.
    B, T, I, H, O = 2, 8, 1, 32, 1

    key = jax.random.PRNGKey(0)
    k_x, k_p = jax.random.split(key)
    x = jax.random.normal(k_x, (B, T, I), jnp.float32)
    params = init_params(k_p, I, H, O)

    y = lstm_model_forward(x, params)
    y = jax.block_until_ready(y)

    y_ref = lstm_model_reference(x, params)
    assert y.shape == (B, O)
    assert jnp.allclose(y, y_ref, atol=1e-4, rtol=1e-4), (y, y_ref)

    print("KERNEL_OK")
</pallas_src>

<mosaic_0001>
module attributes {stable_mosaic.version = 11 : i64} {
  func.func @lstm_fc_kernel(%arg0: memref<8x8x1xf32, #tpu.memory_space<vmem>>, %arg1: memref<1x128xf32, #tpu.memory_space<vmem>>, %arg2: memref<32x128xf32, #tpu.memory_space<vmem>>, %arg3: memref<1x128xf32, #tpu.memory_space<vmem>>, %arg4: memref<32x1xf32, #tpu.memory_space<vmem>>, %arg5: memref<1x1xf32, #tpu.memory_space<vmem>>, %arg6: memref<8x1xf32, #tpu.memory_space<vmem>>, %arg7: memref<8x8x128xf32, #tpu.memory_space<vmem>>) attributes {dimension_semantics = [], scalar_prefetch = 0 : i64, scratch_operands = 1 : i64, tpu.core_type = #tpu.core_type<tc>} {
    %c0 = arith.constant 0 : index
    %c0_0 = arith.constant 0 : index
    %c0_1 = arith.constant 0 : index
    %0 = vector.load %arg0[%c0, %c0_0, %c0_1] : memref<8x8x1xf32, #tpu.memory_space<vmem>>, vector<8x8x1xf32>
    %c0_2 = arith.constant 0 : index
    %c0_3 = arith.constant 0 : index
    %1 = vector.load %arg1[%c0_2, %c0_3] : memref<1x128xf32, #tpu.memory_space<vmem>>, vector<1x128xf32>
    %2 = vector.shape_cast %1 : vector<1x128xf32> to vector<1x1x128xf32>
    %3 = vector.broadcast %0 : vector<8x8x1xf32> to vector<8x8x128xf32>
    %4 = vector.broadcast %2 : vector<1x1x128xf32> to vector<8x8x128xf32>
    %5 = arith.mulf %3, %4 : vector<8x8x128xf32>
    %c0_4 = arith.constant 0 : index
    %c0_5 = arith.constant 0 : index
    %6 = vector.load %arg3[%c0_4, %c0_5] : memref<1x128xf32, #tpu.memory_space<vmem>>, vector<1x128xf32>
    %7 = vector.shape_cast %6 : vector<1x128xf32> to vector<1x1x128xf32>
    %8 = vector.broadcast %7 : vector<1x1x128xf32> to vector<8x8x128xf32>
    %9 = arith.addf %5, %8 : vector<8x8x128xf32>
    %c0_6 = arith.constant 0 : index
    %c0_7 = arith.constant 0 : index
    %c0_8 = arith.constant 0 : index
    %10 = vector.load %arg7[%c0_6, %c0_7, %c0_8] : memref<8x8x128xf32, #tpu.memory_space<vmem>>, vector<8x8x128xf32>
    tpu.vector_store %arg7[%c0_6, %c0_7, %c0_8], %9 {strides = array<i32>} : memref<8x8x128xf32, #tpu.memory_space<vmem>>, vector<8x8x128xf32>,
    %c0_9 = arith.constant 0 : index
    %c0_10 = arith.constant 0 : index
    %11 = vector.load %arg2[%c0_9, %c0_10] : memref<32x128xf32, #tpu.memory_space<vmem>>, vector<32x128xf32>
    %cst = arith.constant 0.000000e+00 : f32
    %12 = vector.broadcast %cst : f32 to vector<8x32xf32>
    %cst_11 = arith.constant 0.000000e+00 : f32
    %13 = vector.broadcast %cst_11 : f32 to vector<8x32xf32>
    %c0_i32 = arith.constant 0 : i32
    %14 = arith.index_cast %c0_i32 : i32 to index
    %c0_12 = arith.constant 0 : index
    %c0_13 = arith.constant 0 : index
    %15 = vector.load %arg7[%14, %c0_12, %c0_13] : memref<8x8x128xf32, #tpu.memory_space<vmem>>, vector<1x8x128xf32>
    %16 = vector.shape_cast %15 : vector<1x8x128xf32> to vector<8x128xf32>
    %cst_14 = arith.constant dense<0.000000e+00> : vector<8x128xf32>
    %17 = tpu.matmul %12, %11, %cst_14 {dimension_numbers = #tpu.dot_dimension_numbers<[1], [0], [0], [1], [0, 0, 1, 1], [], []>} : vector<8x32xf32>, vector<32x128xf32>, vector<8x128xf32> -> vector<8x128xf32>
    %18 = arith.addf %16, %17 : vector<8x128xf32>
    %19 = arith.negf %18 : vector<8x128xf32>
    %20 = math.exp %19 : vector<8x128xf32>
    %cst_15 = arith.constant 1.000000e+00 : f32
    %21 = vector.broadcast %cst_15 : f32 to vector<8x128xf32>
    %22 = arith.addf %21, %20 : vector<8x128xf32>
    %23 = arith.divf %21, %22 : vector<8x128xf32>
    %24 = vector.extract_strided_slice %23 {offsets = [0, 0], sizes = [8, 32], strides = [1, 1]} : vector<8x128xf32> to vector<8x32xf32>
    %25 = vector.extract_strided_slice %23 {offsets = [0, 32], sizes = [8, 32], strides = [1, 1]} : vector<8x128xf32> to vector<8x32xf32>
    %26 = vector.extract_strided_slice %23 {offsets = [0, 96], sizes = [8, 32], strides = [1, 1]} : vector<8x128xf32> to vector<8x32xf32>
    %27 = vector.extract_strided_slice %18 {offsets = [0, 64], sizes = [8, 32], strides = [1, 1]} : vector<8x128xf32> to vector<8x32xf32>
    %28 = math.tanh %27 : vector<8x32xf32>
    %29 = arith.mulf %25, %13 : vector<8x32xf32>
    %30 = arith.mulf %24, %28 : vector<8x32xf32>
    %31 = arith.addf %29, %30 : vector<8x32xf32>
    %32 = math.tanh %31 : vector<8x32xf32>
    %33 = arith.mulf %26, %32 : vector<8x32xf32>
    %c1_i32 = arith.constant 1 : i32
    %34 = arith.index_cast %c1_i32 : i32 to index
    %c0_16 = arith.constant 0 : index
    %c0_17 = arith.constant 0 : index
    %35 = vector.load %arg7[%34, %c0_16, %c0_17] : memref<8x8x128xf32, #tpu.memory_space<vmem>>, vector<1x8x128xf32>
    %36 = vector.shape_cast %35 : vector<1x8x128xf32> to vector<8x128xf32>
    %cst_18 = arith.constant dense<0.000000e+00> : vector<8x128xf32>
    %37 = tpu.matmul %33, %11, %cst_18 {dimension_numbers = #tpu.dot_dimension_numbers<[1], [0], [0], [1], [0, 0, 1, 1], [], []>} : vector<8x32xf32>, vector<32x128xf32>, vector<8x128xf32> -> vector<8x128xf32>
    %38 = arith.addf %36, %37 : vector<8x128xf32>
    %39 = arith.negf %38 : vector<8x128xf32>
    %40 = math.exp %39 : vector<8x128xf32>
    %cst_19 = arith.constant 1.000000e+00 : f32
    %41 = vector.broadcast %cst_19 : f32 to vector<8x128xf32>
    %42 = arith.addf %41, %40 : vector<8x128xf32>
    %43 = arith.divf %41, %42 : vector<8x128xf32>
    %44 = vector.extract_strided_slice %43 {offsets = [0, 0], sizes = [8, 32], strides = [1, 1]} : vector<8x128xf32> to vector<8x32xf32>
    %45 = vector.extract_strided_slice %43 {offsets = [0, 32], sizes = [8, 32], strides = [1, 1]} : vector<8x128xf32> to vector<8x32xf32>
    %46 = vector.extract_strided_slice %43 {offsets = [0, 96], sizes = [8, 32], strides = [1, 1]} : vector<8x128xf32> to vector<8x32xf32>
    %47 = vector.extract_strided_slice %38 {offsets = [0, 64], sizes = [8, 32], strides = [1, 1]} : vector<8x128xf32> to vector<8x32xf32>
    %48 = math.tanh %47 : vector<8x32xf32>
    %49 = arith.mulf %45, %31 : vector<8x32xf32>
    %50 = arith.mulf %44, %48 : vector<8x32xf32>
    %51 = arith.addf %49, %50 : vector<8x32xf32>
    %52 = math.tanh %51 : vector<8x32xf32>
    %53 = arith.mulf %46, %52 : vector<8x32xf32>
    %c2_i32 = arith.constant 2 : i32
    %54 = arith.index_cast %c2_i32 : i32 to index
    %c0_20 = arith.constant 0 : index
    %c0_21 = arith.constant 0 : index
    %55 = vector.load %arg7[%54, %c0_20, %c0_21] : memref<8x8x128xf32, #tpu.memory_space<vmem>>, vector<1x8x128xf32>
    %56 = vector.shape_cast %55 : vector<1x8x128xf32> to vector<8x128xf32>
    %cst_22 = arith.constant dense<0.000000e+00> : vector<8x128xf32>
    %57 = tpu.matmul %53, %11, %cst_22 {dimension_numbers = #tpu.dot_dimension_numbers<[1], [0], [0], [1], [0, 0, 1, 1], [], []>} : vector<8x32xf32>, vector<32x128xf32>, vector<8x128xf32> -> vector<8x128xf32>
    %58 = arith.addf %56, %57 : vector<8x128xf32>
    %59 = arith.negf %58 : vector<8x128xf32>
    %60 = math.exp %59 : vector<8x128xf32>
    %cst_23 = arith.constant 1.000000e+00 : f32
    %61 = vector.broadcast %cst_23 : f32 to vector<8x128xf32>
    %62 = arith.addf %61, %60 : vector<8x128xf32>
    %63 = arith.divf %61, %62 : vector<8x128xf32>
    %64 = vector.extract_strided_slice %63 {offsets = [0, 0], sizes = [8, 32], strides = [1, 1]} : vector<8x128xf32> to vector<8x32xf32>
    %65 = vector.extract_strided_slice %63 {offsets = [0, 32], sizes = [8, 32], strides = [1, 1]} : vector<8x128xf32> to vector<8x32xf32>
    %66 = vector.extract_strided_slice %63 {offsets = [0, 96], sizes = [8, 32], strides = [1, 1]} : vector<8x128xf32> to vector<8x32xf32>
    %67 = vector.extract_strided_slice %58 {offsets = [0, 64], sizes = [8, 32], strides = [1, 1]} : vector<8x128xf32> to vector<8x32xf32>
    %68 = math.tanh %67 : vector<8x32xf32>
    %69 = arith.mulf %65, %51 : vector<8x32xf32>
    %70 = arith.mulf %64, %68 : vector<8x32xf32>
    %71 = arith.addf %69, %70 : vector<8x32xf32>
    %72 = math.tanh %71 : vector<8x32xf32>
    %73 = arith.mulf %66, %72 : vector<8x32xf32>
    %c3_i32 = arith.constant 3 : i32
    %74 = arith.index_cast %c3_i32 : i32 to index
    %c0_24 = arith.constant 0 : index
    %c0_25 = arith.constant 0 : index
    %75 = vector.load %arg7[%74, %c0_24, %c0_25] : memref<8x8x128xf32, #tpu.memory_space<vmem>>, vector<1x8x128xf32>
    %76 = vector.shape_cast %75 : vector<1x8x128xf32> to vector<8x128xf32>
    %cst_26 = arith.constant dense<0.000000e+00> : vector<8x128xf32>
    %77 = tpu.matmul %73, %11, %cst_26 {dimension_numbers = #tpu.dot_dimension_numbers<[1], [0], [0], [1], [0, 0, 1, 1], [], []>} : vector<8x32xf32>, vector<32x128xf32>, vector<8x128xf32> -> vector<8x128xf32>
    %78 = arith.addf %76, %77 : vector<8x128xf32>
    %79 = arith.negf %78 : vector<8x128xf32>
    %80 = math.exp %79 : vector<8x128xf32>
    %cst_27 = arith.constant 1.000000e+00 : f32
    %81 = vector.broadcast %cst_27 : f32 to vector<8x128xf32>
    %82 = arith.addf %81, %80 : vector<8x128xf32>
    %83 = arith.divf %81, %82 : vector<8x128xf32>
    %84 = vector.extract_strided_slice %83 {offsets = [0, 0], sizes = [8, 32], strides = [1, 1]} : vector<8x128xf32> to vector<8x32xf32>
    %85 = vector.extract_strided_slice %83 {offsets = [0, 32], sizes = [8, 32], strides = [1, 1]} : vector<8x128xf32> to vector<8x32xf32>
    %86 = vector.extract_strided_slice %83 {offsets = [0, 96], sizes = [8, 32], strides = [1, 1]} : vector<8x128xf32> to vector<8x32xf32>
    %87 = vector.extract_strided_slice %78 {offsets = [0, 64], sizes = [8, 32], strides = [1, 1]} : vector<8x128xf32> to vector<8x32xf32>
    %88 = math.tanh %87 : vector<8x32xf32>
    %89 = arith.mulf %85, %71 : vector<8x32xf32>
    %90 = arith.mulf %84, %88 : vector<8x32xf32>
    %91 = arith.addf %89, %90 : vector<8x32xf32>
    %92 = math.tanh %91 : vector<8x32xf32>
    %93 = arith.mulf %86, %92 : vector<8x32xf32>
    %c4_i32 = arith.constant 4 : i32
    %94 = arith.index_cast %c4_i32 : i32 to index
    %c0_28 = arith.constant 0 : index
    %c0_29 = arith.constant 0 : index
    %95 = vector.load %arg7[%94, %c0_28, %c0_29] : memref<8x8x128xf32, #tpu.memory_space<vmem>>, vector<1x8x128xf32>
    %96 = vector.shape_cast %95 : vector<1x8x128xf32> to vector<8x128xf32>
    %cst_30 = arith.constant dense<0.000000e+00> : vector<8x128xf32>
    %97 = tpu.matmul %93, %11, %cst_30 {dimension_numbers = #tpu.dot_dimension_numbers<[1], [0], [0], [1], [0, 0, 1, 1], [], []>} : vector<8x32xf32>, vector<32x128xf32>, vector<8x128xf32> -> vector<8x128xf32>
    %98 = arith.addf %96, %97 : vector<8x128xf32>
    %99 = arith.negf %98 : vector<8x128xf32>
    %100 = math.exp %99 : vector<8x128xf32>
    %cst_31 = arith.constant 1.000000e+00 : f32
    %101 = vector.broadcast %cst_31 : f32 to vector<8x128xf32>
    %102 = arith.addf %101, %100 : vector<8x128xf32>
    %103 = arith.divf %101, %102 : vector<8x128xf32>
    %104 = vector.extract_strided_slice %103 {offsets = [0, 0], sizes = [8, 32], strides = [1, 1]} : vector<8x128xf32> to vector<8x32xf32>
    %105 = vector.extract_strided_slice %103 {offsets = [0, 32], sizes = [8, 32], strides = [1, 1]} : vector<8x128xf32> to vector<8x32xf32>
    %106 = vector.extract_strided_slice %103 {offsets = [0, 96], sizes = [8, 32], strides = [1, 1]} : vector<8x128xf32> to vector<8x32xf32>
    %107 = vector.extract_strided_slice %98 {offsets = [0, 64], sizes = [8, 32], strides = [1, 1]} : vector<8x128xf32> to vector<8x32xf32>
    %108 = math.tanh %107 : vector<8x32xf32>
    %109 = arith.mulf %105, %91 : vector<8x32xf32>
    %110 = arith.mulf %104, %108 : vector<8x32xf32>
    %111 = arith.addf %109, %110 : vector<8x32xf32>
    %112 = math.tanh %111 : vector<8x32xf32>
    %113 = arith.mulf %106, %112 : vector<8x32xf32>
    %c5_i32 = arith.constant 5 : i32
    %114 = arith.index_cast %c5_i32 : i32 to index
    %c0_32 = arith.constant 0 : index
    %c0_33 = arith.constant 0 : index
    %115 = vector.load %arg7[%114, %c0_32, %c0_33] : memref<8x8x128xf32, #tpu.memory_space<vmem>>, vector<1x8x128xf32>
    %116 = vector.shape_cast %115 : vector<1x8x128xf32> to vector<8x128xf32>
    %cst_34 = arith.constant dense<0.000000e+00> : vector<8x128xf32>
    %117 = tpu.matmul %113, %11, %cst_34 {dimension_numbers = #tpu.dot_dimension_numbers<[1], [0], [0], [1], [0, 0, 1, 1], [], []>} : vector<8x32xf32>, vector<32x128xf32>, vector<8x128xf32> -> vector<8x128xf32>
    %118 = arith.addf %116, %117 : vector<8x128xf32>
    %119 = arith.negf %118 : vector<8x128xf32>
    %120 = math.exp %119 : vector<8x128xf32>
    %cst_35 = arith.constant 1.000000e+00 : f32
    %121 = vector.broadcast %cst_35 : f32 to vector<8x128xf32>
    %122 = arith.addf %121, %120 : vector<8x128xf32>
    %123 = arith.divf %121, %122 : vector<8x128xf32>
    %124 = vector.extract_strided_slice %123 {offsets = [0, 0], sizes = [8, 32], strides = [1, 1]} : vector<8x128xf32> to vector<8x32xf32>
    %125 = vector.extract_strided_slice %123 {offsets = [0, 32], sizes = [8, 32], strides = [1, 1]} : vector<8x128xf32> to vector<8x32xf32>
    %126 = vector.extract_strided_slice %123 {offsets = [0, 96], sizes = [8, 32], strides = [1, 1]} : vector<8x128xf32> to vector<8x32xf32>
    %127 = vector.extract_strided_slice %118 {offsets = [0, 64], sizes = [8, 32], strides = [1, 1]} : vector<8x128xf32> to vector<8x32xf32>
    %128 = math.tanh %127 : vector<8x32xf32>
    %129 = arith.mulf %125, %111 : vector<8x32xf32>
    %130 = arith.mulf %124, %128 : vector<8x32xf32>
    %131 = arith.addf %129, %130 : vector<8x32xf32>
    %132 = math.tanh %131 : vector<8x32xf32>
    %133 = arith.mulf %126, %132 : vector<8x32xf32>
    %c6_i32 = arith.constant 6 : i32
    %134 = arith.index_cast %c6_i32 : i32 to index
    %c0_36 = arith.constant 0 : index
    %c0_37 = arith.constant 0 : index
    %135 = vector.load %arg7[%134, %c0_36, %c0_37] : memref<8x8x128xf32, #tpu.memory_space<vmem>>, vector<1x8x128xf32>
    %136 = vector.shape_cast %135 : vector<1x8x128xf32> to vector<8x128xf32>
    %cst_38 = arith.constant dense<0.000000e+00> : vector<8x128xf32>
    %137 = tpu.matmul %133, %11, %cst_38 {dimension_numbers = #tpu.dot_dimension_numbers<[1], [0], [0], [1], [0, 0, 1, 1], [], []>} : vector<8x32xf32>, vector<32x128xf32>, vector<8x128xf32> -> vector<8x128xf32>
    %138 = arith.addf %136, %137 : vector<8x128xf32>
    %139 = arith.negf %138 : vector<8x128xf32>
    %140 = math.exp %139 : vector<8x128xf32>
    %cst_39 = arith.constant 1.000000e+00 : f32
    %141 = vector.broadcast %cst_39 : f32 to vector<8x128xf32>
    %142 = arith.addf %141, %140 : vector<8x128xf32>
    %143 = arith.divf %141, %142 : vector<8x128xf32>
    %144 = vector.extract_strided_slice %143 {offsets = [0, 0], sizes = [8, 32], strides = [1, 1]} : vector<8x128xf32> to vector<8x32xf32>
    %145 = vector.extract_strided_slice %143 {offsets = [0, 32], sizes = [8, 32], strides = [1, 1]} : vector<8x128xf32> to vector<8x32xf32>
    %146 = vector.extract_strided_slice %143 {offsets = [0, 96], sizes = [8, 32], strides = [1, 1]} : vector<8x128xf32> to vector<8x32xf32>
    %147 = vector.extract_strided_slice %138 {offsets = [0, 64], sizes = [8, 32], strides = [1, 1]} : vector<8x128xf32> to vector<8x32xf32>
    %148 = math.tanh %147 : vector<8x32xf32>
    %149 = arith.mulf %145, %131 : vector<8x32xf32>
    %150 = arith.mulf %144, %148 : vector<8x32xf32>
    %151 = arith.addf %149, %150 : vector<8x32xf32>
    %152 = math.tanh %151 : vector<8x32xf32>
    %153 = arith.mulf %146, %152 : vector<8x32xf32>
    %c7_i32 = arith.constant 7 : i32
    %154 = arith.index_cast %c7_i32 : i32 to index
    %c0_40 = arith.constant 0 : index
    %c0_41 = arith.constant 0 : index
    %155 = vector.load %arg7[%154, %c0_40, %c0_41] : memref<8x8x128xf32, #tpu.memory_space<vmem>>, vector<1x8x128xf32>
    %156 = vector.shape_cast %155 : vector<1x8x128xf32> to vector<8x128xf32>
    %cst_42 = arith.constant dense<0.000000e+00> : vector<8x128xf32>
    %157 = tpu.matmul %153, %11, %cst_42 {dimension_numbers = #tpu.dot_dimension_numbers<[1], [0], [0], [1], [0, 0, 1, 1], [], []>} : vector<8x32xf32>, vector<32x128xf32>, vector<8x128xf32> -> vector<8x128xf32>
    %158 = arith.addf %156, %157 : vector<8x128xf32>
    %159 = arith.negf %158 : vector<8x128xf32>
    %160 = math.exp %159 : vector<8x128xf32>
    %cst_43 = arith.constant 1.000000e+00 : f32
    %161 = vector.broadcast %cst_43 : f32 to vector<8x128xf32>
    %162 = arith.addf %161, %160 : vector<8x128xf32>
    %163 = arith.divf %161, %162 : vector<8x128xf32>
    %164 = vector.extract_strided_slice %163 {offsets = [0, 0], sizes = [8, 32], strides = [1, 1]} : vector<8x128xf32> to vector<8x32xf32>
    %165 = vector.extract_strided_slice %163 {offsets = [0, 32], sizes = [8, 32], strides = [1, 1]} : vector<8x128xf32> to vector<8x32xf32>
    %166 = vector.extract_strided_slice %163 {offsets = [0, 96], sizes = [8, 32], strides = [1, 1]} : vector<8x128xf32> to vector<8x32xf32>
    %167 = vector.extract_strided_slice %158 {offsets = [0, 64], sizes = [8, 32], strides = [1, 1]} : vector<8x128xf32> to vector<8x32xf32>
    %168 = math.tanh %167 : vector<8x32xf32>
    %169 = arith.mulf %165, %151 : vector<8x32xf32>
    %170 = arith.mulf %164, %168 : vector<8x32xf32>
    %171 = arith.addf %169, %170 : vector<8x32xf32>
    %172 = math.tanh %171 : vector<8x32xf32>
    %173 = arith.mulf %166, %172 : vector<8x32xf32>
    %c8_i32 = arith.constant 8 : i32
    %c0_44 = arith.constant 0 : index
    %c0_45 = arith.constant 0 : index
    %174 = vector.load %arg4[%c0_44, %c0_45] : memref<32x1xf32, #tpu.memory_space<vmem>>, vector<32x1xf32>
    %cst_46 = arith.constant dense<0.000000e+00> : vector<8x1xf32>
    %175 = tpu.matmul %173, %174, %cst_46 {dimension_numbers = #tpu.dot_dimension_numbers<[1], [0], [0], [1], [0, 0, 1, 1], [], []>} : vector<8x32xf32>, vector<32x1xf32>, vector<8x1xf32> -> vector<8x1xf32>
    %c0_47 = arith.constant 0 : index
    %c0_48 = arith.constant 0 : index
    %176 = vector.load %arg5[%c0_47, %c0_48] : memref<1x1xf32, #tpu.memory_space<vmem>>, vector<1x1xf32>
    %177 = vector.broadcast %176 : vector<1x1xf32> to vector<8x1xf32>
    %178 = arith.addf %175, %177 : vector<8x1xf32>
    %c0_49 = arith.constant 0 : index
    %c0_50 = arith.constant 0 : index
    %179 = vector.load %arg6[%c0_49, %c0_50] : memref<8x1xf32, #tpu.memory_space<vmem>>, vector<8x1xf32>
    tpu.vector_store %arg6[%c0_49, %c0_50], %178 {strides = array<i32>} : memref<8x1xf32, #tpu.memory_space<vmem>>, vector<8x1xf32>,
    return
  }
}

</mosaic_0001>

<llo_original>
// kernel: _lstm_model_forward.1
$region0: #{_lstm_model_forward.1}
  #allocation0 [shape = 'u32[]', space=smem, size = 0x4, offset = 0x4, fixed_abs, tag = 'smem constant byte address 0x4 - core index']
  #allocation1 [shape = 'u32[144,128]{1,0:T(1,128)}', space=vmem, size = 0x12000, scoped, tag = 'internal scratch']
  #allocation2 [shape = 'f32[8,8,128]{2,1,0:T(8,128)}', space=vmem, size = 0x8000, scoped, tag = 'scratch operand']
  #allocation3 [shape = 'f32[1,1]{1,0:T(1,128)S(1)}', space=vmem, size = 0x200, scoped, tag = 'scoped memory for _lstm_model_forward.1']
  %s0 = inlined_call_operand.vmem [shape: f32[8,8,1], index: 0, kind: input, shape index: {}]
  %s1 = inlined_call_operand.vmem [shape: f32[1,128], index: 1, kind: input, shape index: {}]
  %s2 = inlined_call_operand.vmem [shape: f32[32,128], index: 2, kind: input, shape index: {}]
  %s3 = inlined_call_operand.vmem [shape: f32[1,128], index: 3, kind: input, shape index: {}]
  %s4 = inlined_call_operand.vmem [shape: f32[32,1], index: 4, kind: input, shape index: {}]
  %s5 = inlined_call_operand.<no memory space> [shape: f32[1,1], index: 5, kind: input, shape index: {}]
  %s6 = inlined_call_operand.vmem [shape: f32[8,1], index: 6, kind: output, shape index: {}]
  %s7 = sld [smem:[#allocation0]]
  $region34: #{_lstm_model_forward.1} parent=0
    _
  %s9 = ssub.s32 1, %s7
  %s10 = scalar_select 0, %s9, %s7
  %v11 = vstv %s5
  %12 = vst [vmem:[#allocation3] sm:$0x1] %v11
  // Predicated region
  $region2: #{_lstm_model_forward.1} parent=0 // pred_check
    _
  $region3: #{_lstm_model_forward.1} parent=0 // pred_check_branch
    %14 = sbr.rel (0) target = $region5
  $region4: #{_lstm_model_forward.1} parent=0 // pred_region
    _
  $region5: #{_lstm_model_forward.1} parent=0 // pred_fallthru
    _
  // Predicated region
  $region6: #{_lstm_model_forward.1} parent=0 // pred_check
    _
  $region7: #{_lstm_model_forward.1} parent=0 // pred_check_branch
    %16 = sbr.rel (0) target = $region9
  $region8: #{_lstm_model_forward.1} parent=0 // pred_region
    _
  $region9: #{_lstm_model_forward.1} parent=0 // pred_fallthru
    _
  // Predicated region
  $region10: #{_lstm_model_forward.1} parent=0 // pred_check
    _
  $region11: #{_lstm_model_forward.1} parent=0 // pred_check_branch
    %18 = sbr.rel (0) target = $region13
  $region12: #{_lstm_model_forward.1} parent=0 // pred_region
    _
  $region13: #{_lstm_model_forward.1} parent=0 // pred_fallthru
    _
  // Predicated region
  $region14: #{_lstm_model_forward.1} parent=0 // pred_check
    _
  $region15: #{_lstm_model_forward.1} parent=0 // pred_check_branch
    %20 = sbr.rel (0) target = $region17
  $region16: #{_lstm_model_forward.1} parent=0 // pred_region
    _
  $region17: #{_lstm_model_forward.1} parent=0 // pred_fallthru
    _
  // Predicated region
  $region18: #{_lstm_model_forward.1} parent=0 // pred_check
    _
  $region19: #{_lstm_model_forward.1} parent=0 // pred_check_branch
    %22 = sbr.rel (0) target = $region21
  $region20: #{_lstm_model_forward.1} parent=0 // pred_region
    _
  $region21: #{_lstm_model_forward.1} parent=0 // pred_fallthru
    _
  // Predicated region
  $region22: #{_lstm_model_forward.1} parent=0 // pred_check
    _
  $region23: #{_lstm_model_forward.1} parent=0 // pred_check_branch
    %24 = sbr.rel (0) target = $region25
  $region24: #{_lstm_model_forward.1} parent=0 // pred_region
    _
  $region25: #{_lstm_model_forward.1} parent=0 // pred_fallthru
    _
  %v25 = vld [vmem:[%s0] sm:$0xff]
  %v26 = vld [vmem:[%s0 + $0x8] sm:$0xff]
  %v27 = vld [vmem:[%s0 + $0x10] sm:$0xff]
  %v28 = vld [vmem:[%s0 + $0x18] sm:$0xff]
  %v29 = vld [vmem:[%s0 + $0x20] sm:$0xff]
  %v30 = vld [vmem:[%s0 + $0x28] sm:$0xff]
  %v31 = vld [vmem:[%s0 + $0x30] sm:$0xff]
  %v32 = vld [vmem:[%s0 + $0x38] sm:$0xff]
  %v33 = vld [vmem:[%s1] sm:$0x1]
  %35 = vset.pattern.permute.xlu0 0
  %36 = vperm.xlu0 %35, %v25
  %v37 = vpop.permute.xlu0 %36
  %40 = vset.pattern.permute.xlu0 0
  %41 = vperm.xlu0 %40, %v26
  %v42 = vpop.permute.xlu0 %41
  %45 = vset.pattern.permute.xlu0 0
  %46 = vperm.xlu0 %45, %v27
  %v47 = vpop.permute.xlu0 %46
  %50 = vset.pattern.permute.xlu0 0
  %51 = vperm.xlu0 %50, %v28
  %v52 = vpop.permute.xlu0 %51
  %55 = vset.pattern.permute.xlu0 0
  %56 = vperm.xlu0 %55, %v29
  %v57 = vpop.permute.xlu0 %56
  %60 = vset.pattern.permute.xlu0 0
  %61 = vperm.xlu0 %60, %v30
  %v62 = vpop.permute.xlu0 %61
  %65 = vset.pattern.permute.xlu0 0
  %66 = vperm.xlu0 %65, %v31
  %v67 = vpop.permute.xlu0 %66
  %70 = vset.pattern.permute.xlu0 0
  %71 = vperm.xlu0 %70, %v32
  %v72 = vpop.permute.xlu0 %71
  %v75 = vlaneseq
  %v76 = vshrl.u32 %v75, 7
  %v77 = vsub.s32 0, %v76
  %v78 = vrot.slane %v33, %v77
  %v80 = vmul.f32 %v37, %v78
  %v81 = vmul.f32 %v42, %v78
  %v82 = vmul.f32 %v47, %v78
  %v83 = vmul.f32 %v52, %v78
  %v84 = vmul.f32 %v57, %v78
  %v85 = vmul.f32 %v62, %v78
  %v86 = vmul.f32 %v67, %v78
  %v87 = vmul.f32 %v72, %v78
  %v88 = vld [vmem:[%s3] sm:$0x1]
  %v90 = vlaneseq
  %v91 = vshrl.u32 %v90, 7
  %v92 = vsub.s32 0, %v91
  %v93 = vrot.slane %v88, %v92
  %v95 = vadd.f32 %v80, %v93
  %v96 = vadd.f32 %v81, %v93
  %v97 = vadd.f32 %v82, %v93
  %v98 = vadd.f32 %v83, %v93
  %v99 = vadd.f32 %v84, %v93
  %v100 = vadd.f32 %v85, %v93
  %v101 = vadd.f32 %v86, %v93
  %v102 = vadd.f32 %v87, %v93
  %103 = vst [vmem:[#allocation2] sm:$0xff] %v95
  %104 = vst [vmem:[#allocation2 + $0x8] sm:$0xff] %v96
  %105 = vst [vmem:[#allocation2 + $0x10] sm:$0xff] %v97
  %106 = vst [vmem:[#allocation2 + $0x18] sm:$0xff] %v98
  %107 = vst [vmem:[#allocation2 + $0x20] sm:$0xff] %v99
  %108 = vst [vmem:[#allocation2 + $0x28] sm:$0xff] %v100
  %109 = vst [vmem:[#allocation2 + $0x30] sm:$0xff] %v101
  %110 = vst [vmem:[#allocation2 + $0x38] sm:$0xff] %v102
  %v111 = vld [vmem:[%s2] sm:$0xff]
  %v112 = vld [vmem:[%s2 + $0x8] sm:$0xff]
  %v113 = vld [vmem:[%s2 + $0x10] sm:$0xff]
  %v114 = vld [vmem:[%s2 + $0x18] sm:$0xff]
  %v115 = vld [vmem:[#allocation2] sm:$0xff]
  %vm116 = vcmask 261120
  %v118 = vsel %vm116, 0.0, 0
  %120 = vmatprep.subr.mxu0 0.0
  %121 = vmatpush1.msra.mxu0 %v111
  %122 = vmatprep.subr.mxu0 0.0
  %123 = vmatpush1.msra.mxu0 %v112
  %124 = vmatprep.subr.mxu0 0.0
  %125 = vmatpush1.msra.mxu0 %v113
  %126 = vmatprep.subr.mxu0 0.0
  %127 = vmatpush1.msra.mxu0 %v114
  %128 = vmatprep.subr.mxu0 0.0
  %129 = vmatpush1.msra.mxu0 0.0
  %130 = vmatprep.subr.mxu0 0.0
  %131 = vmatpush1.msra.mxu0 0.0
  %132 = vmatprep.subr.mxu0 0.0
  %133 = vmatpush1.msra.mxu0 0.0
  %134 = vmatprep.subr.mxu0 0.0
  %135 = vmatpush1.msra.mxu0 0.0
  %136 = vmatprep.subr.mxu0 0.0
  %137 = vmatpush1.msra.mxu0 0.0
  %138 = vmatprep.subr.mxu0 0.0
  %139 = vmatpush1.msra.mxu0 0.0
  %140 = vmatprep.subr.mxu0 0.0
  %141 = vmatpush1.msra.mxu0 0.0
  %142 = vmatprep.subr.mxu0 0.0
  %143 = vmatpush1.msra.mxu0 0.0
  %144 = vmatprep.subr.mxu0 0.0
  %145 = vmatpush1.msra.mxu0 0.0
  %146 = vmatprep.subr.mxu0 0.0
  %147 = vmatpush1.msra.mxu0 0.0
  %148 = vmatprep.subr.mxu0 0.0
  %149 = vmatpush1.msra.mxu0 0.0
  %150 = vmatprep.subr.mxu0 0.0
  %151 = vmatpush1.msra.mxu0 0.0
  %152 = vmatprep.subr.mxu0 0.0
  %153 = vmatpush1.msra.mxu0 0.0
  %154 = vmatprep.subr.mxu0 0.0
  %155 = vmatpush1.msra.mxu0 0.0
  %156 = vmatprep.subr.mxu0 0.0
  %157 = vmatpush1.msra.mxu0 0.0
  %158 = vmatprep.subr.mxu0 0.0
  %159 = vmatpush1.msra.mxu0 0.0
  %160 = vmatprep.subr.mxu0 0.0
  %161 = vmatpush1.msra.mxu0 0.0
  %162 = vmatprep.subr.mxu0 0.0
  %163 = vmatpush1.msra.mxu0 0.0
  %164 = vmatprep.subr.mxu0 0.0
  %165 = vmatpush1.msra.mxu0 0.0
  %166 = vmatprep.subr.mxu0 0.0
  %167 = vmatpush1.msra.mxu0 0.0
  %168 = vmatprep.subr.mxu0 0.0
  %169 = vmatpush1.msra.mxu0 0.0
  %170 = vmatprep.subr.mxu0 0.0
  %171 = vmatpush1.msra.mxu0 0.0
  %172 = vmatprep.subr.mxu0 0.0
  %173 = vmatpush1.msra.mxu0 0.0
  %174 = vmatprep.subr.mxu0 0.0
  %175 = vmatpush1.msra.mxu0 0.0
  %176 = vmatprep.subr.mxu0 0.0
  %177 = vmatpush1.msra.mxu0 0.0
  %178 = vmatprep.subr.mxu0 0.0
  %179 = vmatpush1.msra.mxu0 0.0
  %180 = vmatprep.subr.mxu0 0.0
  %181 = vmatpush1.msra.mxu0 0.0
  %182 = vmatprep.subr.mxu0 0.0
  %183 = vmatpush1.msra.mxu0 0.0
  %184 = vmatprep.mubr.f32.mxu0 0.0
  %185 = vmatmul.mubr.f32.gmra.mrb[0].mxu0 %v118
  %v186 = vpop.f32.mrb[0].mxu0
  %v187 = vadd.f32 0.0, %v186
  %v188 = vpop.f32.mrb[0].mxu0
  %189 = vdwg.mxu0
  %v190 = vadd.f32 %v115, %v187
  %v191 = vxor.u32 %v190, 2147483648
  %v192 = vmul.f32 %v191, 1.442695
  %v193 = vpow.pop %v192
  %v194 = vadd.f32 %v193, 1.0
  %v195 = vrcp.pop %v194
  %v196 = vmul.f32 1.0, %v195
  %v197 = vtanh.pop %v190
  %v198 = vmul.f32 %v196, 0.0
  %200 = vrot.lane.b32.xlu0 %v197, 64
  %v201 = vpop.permute.xlu0 %200
  %v203 = vmul.f32 %v196, %v201
  %205 = vrot.lane.b32.xlu0 %v203, 32
  %v206 = vpop.permute.xlu0 %205
  %v208 = vadd.f32 %v198, %v206
  %v209 = vtanh.pop %v208
  %211 = vrot.lane.b32.xlu0 %v209, 64
  %v212 = vpop.permute.xlu0 %211
  %v214 = vmul.f32 %v196, %v212
  %s215 = scalar_lea.vmem [#allocation2], 8
  %v216 = vld [vmem:[%s215] sm:$0xff]
  %218 = vrot.lane.b32.xlu0 %v214, 32
  %v219 = vpop.permute.xlu0 %218
  %v220 = vsel %vm116, %v219, 0
  %222 = vmatprep.subr.mxu0 0.0
  %223 = vmatpush1.msra.mxu0 %v111
  %224 = vmatprep.subr.mxu0 0.0
  %225 = vmatpush1.msra.mxu0 %v112
  %226 = vmatprep.subr.mxu0 0.0
  %227 = vmatpush1.msra.mxu0 %v113
  %228 = vmatprep.subr.mxu0 0.0
  %229 = vmatpush1.msra.mxu0 %v114
  %230 = vmatprep.subr.mxu0 0.0
  %231 = vmatpush1.msra.mxu0 0.0
  %232 = vmatprep.subr.mxu0 0.0
  %233 = vmatpush1.msra.mxu0 0.0
  %234 = vmatprep.subr.mxu0 0.0
  %235 = vmatpush1.msra.mxu0 0.0
  %236 = vmatprep.subr.mxu0 0.0
  %237 = vmatpush1.msra.mxu0 0.0
  %238 = vmatprep.subr.mxu0 0.0
  %239 = vmatpush1.msra.mxu0 0.0
  %240 = vmatprep.subr.mxu0 0.0
  %241 = vmatpush1.msra.mxu0 0.0
  %242 = vmatprep.subr.mxu0 0.0
  %243 = vmatpush1.msra.mxu0 0.0
  %244 = vmatprep.subr.mxu0 0.0
  %245 = vmatpush1.msra.mxu0 0.0
  %246 = vmatprep.subr.mxu0 0.0
  %247 = vmatpush1.msra.mxu0 0.0
  %248 = vmatprep.subr.mxu0 0.0
  %249 = vmatpush1.msra.mxu0 0.0
  %250 = vmatprep.subr.mxu0 0.0
  %251 = vmatpush1.msra.mxu0 0.0
  %252 = vmatprep.subr.mxu0 0.0
  %253 = vmatpush1.msra.mxu0 0.0
  %254 = vmatprep.subr.mxu0 0.0
  %255 = vmatpush1.msra.mxu0 0.0
  %256 = vmatprep.subr.mxu0 0.0
  %257 = vmatpush1.msra.mxu0 0.0
  %258 = vmatprep.subr.mxu0 0.0
  %259 = vmatpush1.msra.mxu0 0.0
  %260 = vmatprep.subr.mxu0 0.0
  %261 = vmatpush1.msra.mxu0 0.0
  %262 = vmatprep.subr.mxu0 0.0
  %263 = vmatpush1.msra.mxu0 0.0
  %264 = vmatprep.subr.mxu0 0.0
  %265 = vmatpush1.msra.mxu0 0.0
  %266 = vmatprep.subr.mxu0 0.0
  %267 = vmatpush1.msra.mxu0 0.0
  %268 = vmatprep.subr.mxu0 0.0
  %269 = vmatpush1.msra.mxu0 0.0
  %270 = vmatprep.subr.mxu0 0.0
  %271 = vmatpush1.msra.mxu0 0.0
  %272 = vmatprep.subr.mxu0 0.0
  %273 = vmatpush1.msra.mxu0 0.0
  %274 = vmatprep.subr.mxu0 0.0
  %275 = vmatpush1.msra.mxu0 0.0
  %276 = vmatprep.subr.mxu0 0.0
  %277 = vmatpush1.msra.mxu0 0.0
  %278 = vmatprep.subr.mxu0 0.0
  %279 = vmatpush1.msra.mxu0 0.0
  %280 = vmatprep.subr.mxu0 0.0
  %281 = vmatpush1.msra.mxu0 0.0
  %282 = vmatprep.subr.mxu0 0.0
  %283 = vmatpush1.msra.mxu0 0.0
  %284 = vmatprep.subr.mxu0 0.0
  %285 = vmatpush1.msra.mxu0 0.0
  %286 = vmatprep.mubr.f32.mxu0 0.0
  %287 = vmatmul.mubr.f32.gmra.mrb[0].mxu0 %v220
  %v288 = vpop.f32.mrb[0].mxu0
  %v289 = vadd.f32 0.0, %v288
  %v290 = vpop.f32.mrb[0].mxu0
  %291 = vdwg.mxu0
  %v292 = vadd.f32 %v216, %v289
  %v293 = vxor.u32 %v292, 2147483648
  %v294 = vmul.f32 %v293, 1.442695
  %v295 = vpow.pop %v294
  %v296 = vadd.f32 %v295, 1.0
  %v297 = vrcp.pop %v296
  %v298 = vmul.f32 1.0, %v297
  %v299 = vtanh.pop %v292
  %v300 = vmul.f32 %v298, %v208
  %302 = vrot.lane.b32.xlu0 %v299, 64
  %v303 = vpop.permute.xlu0 %302
  %v305 = vmul.f32 %v298, %v303
  %307 = vrot.lane.b32.xlu0 %v305, 32
  %v308 = vpop.permute.xlu0 %307
  %v310 = vadd.f32 %v300, %v308
  %v311 = vtanh.pop %v310
  %313 = vrot.lane.b32.xlu0 %v311, 64
  %v314 = vpop.permute.xlu0 %313
  %v316 = vmul.f32 %v298, %v314
  %s317 = scalar_lea.vmem [#allocation2], 16
  %v318 = vld [vmem:[%s317] sm:$0xff]
  %320 = vrot.lane.b32.xlu0 %v316, 32
  %v321 = vpop.permute.xlu0 %320
  %v322 = vsel %vm116, %v321, 0
  %324 = vmatprep.subr.mxu0 0.0
  %325 = vmatpush1.msra.mxu0 %v111
  %326 = vmatprep.subr.mxu0 0.0
  %327 = vmatpush1.msra.mxu0 %v112
  %328 = vmatprep.subr.mxu0 0.0
  %329 = vmatpush1.msra.mxu0 %v113
  %330 = vmatprep.subr.mxu0 0.0
  %331 = vmatpush1.msra.mxu0 %v114
  %332 = vmatprep.subr.mxu0 0.0
  %333 = vmatpush1.msra.mxu0 0.0
  %334 = vmatprep.subr.mxu0 0.0
  %335 = vmatpush1.msra.mxu0 0.0
  %336 = vmatprep.subr.mxu0 0.0
  %337 = vmatpush1.msra.mxu0 0.0
  %338 = vmatprep.subr.mxu0 0.0
  %339 = vmatpush1.msra.mxu0 0.0
  %340 = vmatprep.subr.mxu0 0.0
  %341 = vmatpush1.msra.mxu0 0.0
  %342 = vmatprep.subr.mxu0 0.0
  %343 = vmatpush1.msra.mxu0 0.0
  %344 = vmatprep.subr.mxu0 0.0
  %345 = vmatpush1.msra.mxu0 0.0
  %346 = vmatprep.subr.mxu0 0.0
  %347 = vmatpush1.msra.mxu0 0.0
  %348 = vmatprep.subr.mxu0 0.0
  %349 = vmatpush1.msra.mxu0 0.0
  %350 = vmatprep.subr.mxu0 0.0
  %351 = vmatpush1.msra.mxu0 0.0
  %352 = vmatprep.subr.mxu0 0.0
  %353 = vmatpush1.msra.mxu0 0.0
  %354 = vmatprep.subr.mxu0 0.0
  %355 = vmatpush1.msra.mxu0 0.0
  %356 = vmatprep.subr.mxu0 0.0
  %357 = vmatpush1.msra.mxu0 0.0
  %358 = vmatprep.subr.mxu0 0.0
  %359 = vmatpush1.msra.mxu0 0.0
  %360 = vmatprep.subr.mxu0 0.0
  %361 = vmatpush1.msra.mxu0 0.0
  %362 = vmatprep.subr.mxu0 0.0
  %363 = vmatpush1.msra.mxu0 0.0
  %364 = vmatprep.subr.mxu0 0.0
  %365 = vmatpush1.msra.mxu0 0.0
  %366 = vmatprep.subr.mxu0 0.0
  %367 = vmatpush1.msra.mxu0 0.0
  %368 = vmatprep.subr.mxu0 0.0
  %369 = vmatpush1.msra.mxu0 0.0
  %370 = vmatprep.subr.mxu0 0.0
  %371 = vmatpush1.msra.mxu0 0.0
  %372 = vmatprep.subr.mxu0 0.0
  %373 = vmatpush1.msra.mxu0 0.0
  %374 = vmatprep.subr.mxu0 0.0
  %375 = vmatpush1.msra.mxu0 0.0
  %376 = vmatprep.subr.mxu0 0.0
  %377 = vmatpush1.msra.mxu0 0.0
  %378 = vmatprep.subr.mxu0 0.0
  %379 = vmatpush1.msra.mxu0 0.0
  %380 = vmatprep.subr.mxu0 0.0
  %381 = vmatpush1.msra.mxu0 0.0
  %382 = vmatprep.subr.mxu0 0.0
  %383 = vmatpush1.msra.mxu0 0.0
  %384 = vmatprep.subr.mxu0 0.0
  %385 = vmatpush1.msra.mxu0 0.0
  %386 = vmatprep.subr.mxu0 0.0
  %387 = vmatpush1.msra.mxu0 0.0
  %388 = vmatprep.mubr.f32.mxu0 0.0
  %389 = vmatmul.mubr.f32.gmra.mrb[0].mxu0 %v322
  %v390 = vpop.f32.mrb[0].mxu0
  %v391 = vadd.f32 0.0, %v390
  %v392 = vpop.f32.mrb[0].mxu0
  %393 = vdwg.mxu0
  %v394 = vadd.f32 %v318, %v391
  %v395 = vxor.u32 %v394, 2147483648
  %v396 = vmul.f32 %v395, 1.442695
  %v397 = vpow.pop %v396
  %v398 = vadd.f32 %v397, 1.0
  %v399 = vrcp.pop %v398
  %v400 = vmul.f32 1.0, %v399
  %v401 = vtanh.pop %v394
  %v402 = vmul.f32 %v400, %v310
  %404 = vrot.lane.b32.xlu0 %v401, 64
  %v405 = vpop.permute.xlu0 %404
  %v407 = vmul.f32 %v400, %v405
  %409 = vrot.lane.b32.xlu0 %v407, 32
  %v410 = vpop.permute.xlu0 %409
  %v412 = vadd.f32 %v402, %v410
  %v413 = vtanh.pop %v412
  %415 = vrot.lane.b32.xlu0 %v413, 64
  %v416 = vpop.permute.xlu0 %415
  %v418 = vmul.f32 %v400, %v416
  %s419 = scalar_lea.vmem [#allocation2], 24
  %v420 = vld [vmem:[%s419] sm:$0xff]
  %422 = vrot.lane.b32.xlu0 %v418, 32
  %v423 = vpop.permute.xlu0 %422
  %v424 = vsel %vm116, %v423, 0
  %426 = vmatprep.subr.mxu0 0.0
  %427 = vmatpush1.msra.mxu0 %v111
  %428 = vmatprep.subr.mxu0 0.0
  %429 = vmatpush1.msra.mxu0 %v112
  %430 = vmatprep.subr.mxu0 0.0
  %431 = vmatpush1.msra.mxu0 %v113
  %432 = vmatprep.subr.mxu0 0.0
  %433 = vmatpush1.msra.mxu0 %v114
  %434 = vmatprep.subr.mxu0 0.0
  %435 = vmatpush1.msra.mxu0 0.0
  %436 = vmatprep.subr.mxu0 0.0
  %437 = vmatpush1.msra.mxu0 0.0
  %438 = vmatprep.subr.mxu0 0.0
  %439 = vmatpush1.msra.mxu0 0.0
  %440 = vmatprep.subr.mxu0 0.0
  %441 = vmatpush1.msra.mxu0 0.0
  %442 = vmatprep.subr.mxu0 0.0
  %443 = vmatpush1.msra.mxu0 0.0
  %444 = vmatprep.subr.mxu0 0.0
  %445 = vmatpush1.msra.mxu0 0.0
  %446 = vmatprep.subr.mxu0 0.0
  %447 = vmatpush1.msra.mxu0 0.0
  %448 = vmatprep.subr.mxu0 0.0
  %449 = vmatpush1.msra.mxu0 0.0
  %450 = vmatprep.subr.mxu0 0.0
  %451 = vmatpush1.msra.mxu0 0.0
  %452 = vmatprep.subr.mxu0 0.0
  %453 = vmatpush1.msra.mxu0 0.0
  %454 = vmatprep.subr.mxu0 0.0
  %455 = vmatpush1.msra.mxu0 0.0
  %456 = vmatprep.subr.mxu0 0.0
  %457 = vmatpush1.msra.mxu0 0.0
  %458 = vmatprep.subr.mxu0 0.0
  %459 = vmatpush1.msra.mxu0 0.0
  %460 = vmatprep.subr.mxu0 0.0
  %461 = vmatpush1.msra.mxu0 0.0
  %462 = vmatprep.subr.mxu0 0.0
  %463 = vmatpush1.msra.mxu0 0.0
  %464 = vmatprep.subr.mxu0 0.0
  %465 = vmatpush1.msra.mxu0 0.0
  %466 = vmatprep.subr.mxu0 0.0
  %467 = vmatpush1.msra.mxu0 0.0
  %468 = vmatprep.subr.mxu0 0.0
  %469 = vmatpush1.msra.mxu0 0.0
  %470 = vmatprep.subr.mxu0 0.0
  %471 = vmatpush1.msra.mxu0 0.0
  %472 = vmatprep.subr.mxu0 0.0
  %473 = vmatpush1.msra.mxu0 0.0
  %474 = vmatprep.subr.mxu0 0.0
  %475 = vmatpush1.msra.mxu0 0.0
  %476 = vmatprep.subr.mxu0 0.0
  %477 = vmatpush1.msra.mxu0 0.0
  %478 = vmatprep.subr.mxu0 0.0
  %479 = vmatpush1.msra.mxu0 0.0
  %480 = vmatprep.subr.mxu0 0.0
  %481 = vmatpush1.msra.mxu0 0.0
  %482 = vmatprep.subr.mxu0 0.0
  %483 = vmatpush1.msra.mxu0 0.0
  %484 = vmatprep.subr.mxu0 0.0
  %485 = vmatpush1.msra.mxu0 0.0
  %486 = vmatprep.subr.mxu0 0.0
  %487 = vmatpush1.msra.mxu0 0.0
  %488 = vmatprep.subr.mxu0 0.0
  %489 = vmatpush1.msra.mxu0 0.0
  %490 = vmatprep.mubr.f32.mxu0 0.0
  %491 = vmatmul.mubr.f32.gmra.mrb[0].mxu0 %v424
  %v492 = vpop.f32.mrb[0].mxu0
  %v493 = vadd.f32 0.0, %v492
  %v494 = vpop.f32.mrb[0].mxu0
  %495 = vdwg.mxu0
  %v496 = vadd.f32 %v420, %v493
  %v497 = vxor.u32 %v496, 2147483648
  %v498 = vmul.f32 %v497, 1.442695
  %v499 = vpow.pop %v498
  %v500 = vadd.f32 %v499, 1.0
  %v501 = vrcp.pop %v500
  %v502 = vmul.f32 1.0, %v501
  %v503 = vtanh.pop %v496
  %v504 = vmul.f32 %v502, %v412
  %506 = vrot.lane.b32.xlu0 %v503, 64
  %v507 = vpop.permute.xlu0 %506
  %v509 = vmul.f32 %v502, %v507
  %511 = vrot.lane.b32.xlu0 %v509, 32
  %v512 = vpop.permute.xlu0 %511
  %v514 = vadd.f32 %v504, %v512
  %v515 = vtanh.pop %v514
  %517 = vrot.lane.b32.xlu0 %v515, 64
  %v518 = vpop.permute.xlu0 %517
  %v520 = vmul.f32 %v502, %v518
  %s521 = scalar_lea.vmem [#allocation2], 32
  %v522 = vld [vmem:[%s521] sm:$0xff]
  %524 = vrot.lane.b32.xlu0 %v520, 32
  %v525 = vpop.permute.xlu0 %524
  %v526 = vsel %vm116, %v525, 0
  %528 = vmatprep.subr.mxu0 0.0
  %529 = vmatpush1.msra.mxu0 %v111
  %530 = vmatprep.subr.mxu0 0.0
  %531 = vmatpush1.msra.mxu0 %v112
  %532 = vmatprep.subr.mxu0 0.0
  %533 = vmatpush1.msra.mxu0 %v113
  %534 = vmatprep.subr.mxu0 0.0
  %535 = vmatpush1.msra.mxu0 %v114
  %536 = vmatprep.subr.mxu0 0.0
  %537 = vmatpush1.msra.mxu0 0.0
  %538 = vmatprep.subr.mxu0 0.0
  %539 = vmatpush1.msra.mxu0 0.0
  %540 = vmatprep.subr.mxu0 0.0
  %541 = vmatpush1.msra.mxu0 0.0
  %542 = vmatprep.subr.mxu0 0.0
  %543 = vmatpush1.msra.mxu0 0.0
  %544 = vmatprep.subr.mxu0 0.0
  %545 = vmatpush1.msra.mxu0 0.0
  %546 = vmatprep.subr.mxu0 0.0
  %547 = vmatpush1.msra.mxu0 0.0
  %548 = vmatprep.subr.mxu0 0.0
  %549 = vmatpush1.msra.mxu0 0.0
  %550 = vmatprep.subr.mxu0 0.0
  %551 = vmatpush1.msra.mxu0 0.0
  %552 = vmatprep.subr.mxu0 0.0
  %553 = vmatpush1.msra.mxu0 0.0
  %554 = vmatprep.subr.mxu0 0.0
  %555 = vmatpush1.msra.mxu0 0.0
  %556 = vmatprep.subr.mxu0 0.0
  %557 = vmatpush1.msra.mxu0 0.0
  %558 = vmatprep.subr.mxu0 0.0
  %559 = vmatpush1.msra.mxu0 0.0
  %560 = vmatprep.subr.mxu0 0.0
  %561 = vmatpush1.msra.mxu0 0.0
  %562 = vmatprep.subr.mxu0 0.0
  %563 = vmatpush1.msra.mxu0 0.0
  %564 = vmatprep.subr.mxu0 0.0
  %565 = vmatpush1.msra.mxu0 0.0
  %566 = vmatprep.subr.mxu0 0.0
  %567 = vmatpush1.msra.mxu0 0.0
  %568 = vmatprep.subr.mxu0 0.0
  %569 = vmatpush1.msra.mxu0 0.0
  %570 = vmatprep.subr.mxu0 0.0
  %571 = vmatpush1.msra.mxu0 0.0
  %572 = vmatprep.subr.mxu0 0.0
  %573 = vmatpush1.msra.mxu0 0.0
  %574 = vmatprep.subr.mxu0 0.0
  %575 = vmatpush1.msra.mxu0 0.0
  %576 = vmatprep.subr.mxu0 0.0
  %577 = vmatpush1.msra.mxu0 0.0
  %578 = vmatprep.subr.mxu0 0.0
  %579 = vmatpush1.msra.mxu0 0.0
  %580 = vmatprep.subr.mxu0 0.0
  %581 = vmatpush1.msra.mxu0 0.0
  %582 = vmatprep.subr.mxu0 0.0
  %583 = vmatpush1.msra.mxu0 0.0
  %584 = vmatprep.subr.mxu0 0.0
  %585 = vmatpush1.msra.mxu0 0.0
  %586 = vmatprep.subr.mxu0 0.0
  %587 = vmatpush1.msra.mxu0 0.0
  %588 = vmatprep.subr.mxu0 0.0
  %589 = vmatpush1.msra.mxu0 0.0
  %590 = vmatprep.subr.mxu0 0.0
  %591 = vmatpush1.msra.mxu0 0.0
  %592 = vmatprep.mubr.f32.mxu0 0.0
  %593 = vmatmul.mubr.f32.gmra.mrb[0].mxu0 %v526
  %v594 = vpop.f32.mrb[0].mxu0
  %v595 = vadd.f32 0.0, %v594
  %v596 = vpop.f32.mrb[0].mxu0
  %597 = vdwg.mxu0
  %v598 = vadd.f32 %v522, %v595
  %v599 = vxor.u32 %v598, 2147483648
  %v600 = vmul.f32 %v599, 1.442695
  %v601 = vpow.pop %v600
  %v602 = vadd.f32 %v601, 1.0
  %v603 = vrcp.pop %v602
  %v604 = vmul.f32 1.0, %v603
  %v605 = vtanh.pop %v598
  %v606 = vmul.f32 %v604, %v514
  %608 = vrot.lane.b32.xlu0 %v605, 64
  %v609 = vpop.permute.xlu0 %608
  %v611 = vmul.f32 %v604, %v609
  %613 = vrot.lane.b32.xlu0 %v611, 32
  %v614 = vpop.permute.xlu0 %613
  %v616 = vadd.f32 %v606, %v614
  %v617 = vtanh.pop %v616
  %619 = vrot.lane.b32.xlu0 %v617, 64
  %v620 = vpop.permute.xlu0 %619
  %v622 = vmul.f32 %v604, %v620
  %s623 = scalar_lea.vmem [#allocation2], 40
  %v624 = vld [vmem:[%s623] sm:$0xff]
  %626 = vrot.lane.b32.xlu0 %v622, 32
  %v627 = vpop.permute.xlu0 %626
  %v628 = vsel %vm116, %v627, 0
  %630 = vmatprep.subr.mxu0 0.0
  %631 = vmatpush1.msra.mxu0 %v111
  %632 = vmatprep.subr.mxu0 0.0
  %633 = vmatpush1.msra.mxu0 %v112
  %634 = vmatprep.subr.mxu0 0.0
  %635 = vmatpush1.msra.mxu0 %v113
  %636 = vmatprep.subr.mxu0 0.0
  %637 = vmatpush1.msra.mxu0 %v114
  %638 = vmatprep.subr.mxu0 0.0
  %639 = vmatpush1.msra.mxu0 0.0
  %640 = vmatprep.subr.mxu0 0.0
  %641 = vmatpush1.msra.mxu0 0.0
  %642 = vmatprep.subr.mxu0 0.0
  %643 = vmatpush1.msra.mxu0 0.0
  %644 = vmatprep.subr.mxu0 0.0
  %645 = vmatpush1.msra.mxu0 0.0
  %646 = vmatprep.subr.mxu0 0.0
  %647 = vmatpush1.msra.mxu0 0.0
  %648 = vmatprep.subr.mxu0 0.0
  %649 = vmatpush1.msra.mxu0 0.0
  %650 = vmatprep.subr.mxu0 0.0
  %651 = vmatpush1.msra.mxu0 0.0
  %652 = vmatprep.subr.mxu0 0.0
  %653 = vmatpush1.msra.mxu0 0.0
  %654 = vmatprep.subr.mxu0 0.0
  %655 = vmatpush1.msra.mxu0 0.0
  %656 = vmatprep.subr.mxu0 0.0
  %657 = vmatpush1.msra.mxu0 0.0
  %658 = vmatprep.subr.mxu0 0.0
  %659 = vmatpush1.msra.mxu0 0.0
  %660 = vmatprep.subr.mxu0 0.0
  %661 = vmatpush1.msra.mxu0 0.0
  %662 = vmatprep.subr.mxu0 0.0
  %663 = vmatpush1.msra.mxu0 0.0
  %664 = vmatprep.subr.mxu0 0.0
  %665 = vmatpush1.msra.mxu0 0.0
  %666 = vmatprep.subr.mxu0 0.0
  %667 = vmatpush1.msra.mxu0 0.0
  %668 = vmatprep.subr.mxu0 0.0
  %669 = vmatpush1.msra.mxu0 0.0
  %670 = vmatprep.subr.mxu0 0.0
  %671 = vmatpush1.msra.mxu0 0.0
  %672 = vmatprep.subr.mxu0 0.0
  %673 = vmatpush1.msra.mxu0 0.0
  %674 = vmatprep.subr.mxu0 0.0
  %675 = vmatpush1.msra.mxu0 0.0
  %676 = vmatprep.subr.mxu0 0.0
  %677 = vmatpush1.msra.mxu0 0.0
  %678 = vmatprep.subr.mxu0 0.0
  %679 = vmatpush1.msra.mxu0 0.0
  %680 = vmatprep.subr.mxu0 0.0
  %681 = vmatpush1.msra.mxu0 0.0
  %682 = vmatprep.subr.mxu0 0.0
  %683 = vmatpush1.msra.mxu0 0.0
  %684 = vmatprep.subr.mxu0 0.0
  %685 = vmatpush1.msra.mxu0 0.0
  %686 = vmatprep.subr.mxu0 0.0
  %687 = vmatpush1.msra.mxu0 0.0
  %688 = vmatprep.subr.mxu0 0.0
  %689 = vmatpush1.msra.mxu0 0.0
  %690 = vmatprep.subr.mxu0 0.0
  %691 = vmatpush1.msra.mxu0 0.0
  %692 = vmatprep.subr.mxu0 0.0
  %693 = vmatpush1.msra.mxu0 0.0
  %694 = vmatprep.mubr.f32.mxu0 0.0
  %695 = vmatmul.mubr.f32.gmra.mrb[0].mxu0 %v628
  %v696 = vpop.f32.mrb[0].mxu0
  %v697 = vadd.f32 0.0, %v696
  %v698 = vpop.f32.mrb[0].mxu0
  %699 = vdwg.mxu0
  %v700 = vadd.f32 %v624, %v697
  %v701 = vxor.u32 %v700, 2147483648
  %v702 = vmul.f32 %v701, 1.442695
  %v703 = vpow.pop %v702
  %v704 = vadd.f32 %v703, 1.0
  %v705 = vrcp.pop %v704
  %v706 = vmul.f32 1.0, %v705
  %v707 = vtanh.pop %v700
  %v708 = vmul.f32 %v706, %v616
  %710 = vrot.lane.b32.xlu0 %v707, 64
  %v711 = vpop.permute.xlu0 %710
  %v713 = vmul.f32 %v706, %v711
  %715 = vrot.lane.b32.xlu0 %v713, 32
  %v716 = vpop.permute.xlu0 %715
  %v718 = vadd.f32 %v708, %v716
  %v719 = vtanh.pop %v718
  %721 = vrot.lane.b32.xlu0 %v719, 64
  %v722 = vpop.permute.xlu0 %721
  %v724 = vmul.f32 %v706, %v722
  %s725 = scalar_lea.vmem [#allocation2], 48
  %v726 = vld [vmem:[%s725] sm:$0xff]
  %728 = vrot.lane.b32.xlu0 %v724, 32
  %v729 = vpop.permute.xlu0 %728
  %v730 = vsel %vm116, %v729, 0
  %732 = vmatprep.subr.mxu0 0.0
  %733 = vmatpush1.msra.mxu0 %v111
  %734 = vmatprep.subr.mxu0 0.0
  %735 = vmatpush1.msra.mxu0 %v112
  %736 = vmatprep.subr.mxu0 0.0
  %737 = vmatpush1.msra.mxu0 %v113
  %738 = vmatprep.subr.mxu0 0.0
  %739 = vmatpush1.msra.mxu0 %v114
  %740 = vmatprep.subr.mxu0 0.0
  %741 = vmatpush1.msra.mxu0 0.0
  %742 = vmatprep.subr.mxu0 0.0
  %743 = vmatpush1.msra.mxu0 0.0
  %744 = vmatprep.subr.mxu0 0.0
  %745 = vmatpush1.msra.mxu0 0.0
  %746 = vmatprep.subr.mxu0 0.0
  %747 = vmatpush1.msra.mxu0 0.0
  %748 = vmatprep.subr.mxu0 0.0
  %749 = vmatpush1.msra.mxu0 0.0
  %750 = vmatprep.subr.mxu0 0.0
  %751 = vmatpush1.msra.mxu0 0.0
  %752 = vmatprep.subr.mxu0 0.0
  %753 = vmatpush1.msra.mxu0 0.0
  %754 = vmatprep.subr.mxu0 0.0
  %755 = vmatpush1.msra.mxu0 0.0
  %756 = vmatprep.subr.mxu0 0.0
  %757 = vmatpush1.msra.mxu0 0.0
  %758 = vmatprep.subr.mxu0 0.0
  %759 = vmatpush1.msra.mxu0 0.0
  %760 = vmatprep.subr.mxu0 0.0
  %761 = vmatpush1.msra.mxu0 0.0
  %762 = vmatprep.subr.mxu0 0.0
  %763 = vmatpush1.msra.mxu0 0.0
  %764 = vmatprep.subr.mxu0 0.0
  %765 = vmatpush1.msra.mxu0 0.0
  %766 = vmatprep.subr.mxu0 0.0
  %767 = vmatpush1.msra.mxu0 0.0
  %768 = vmatprep.subr.mxu0 0.0
  %769 = vmatpush1.msra.mxu0 0.0
  %770 = vmatprep.subr.mxu0 0.0
  %771 = vmatpush1.msra.mxu0 0.0
  %772 = vmatprep.subr.mxu0 0.0
  %773 = vmatpush1.msra.mxu0 0.0
  %774 = vmatprep.subr.mxu0 0.0
  %775 = vmatpush1.msra.mxu0 0.0
  %776 = vmatprep.subr.mxu0 0.0
  %777 = vmatpush1.msra.mxu0 0.0
  %778 = vmatprep.subr.mxu0 0.0
  %779 = vmatpush1.msra.mxu0 0.0
  %780 = vmatprep.subr.mxu0 0.0
  %781 = vmatpush1.msra.mxu0 0.0
  %782 = vmatprep.subr.mxu0 0.0
  %783 = vmatpush1.msra.mxu0 0.0
  %784 = vmatprep.subr.mxu0 0.0
  %785 = vmatpush1.msra.mxu0 0.0
  %786 = vmatprep.subr.mxu0 0.0
  %787 = vmatpush1.msra.mxu0 0.0
  %788 = vmatprep.subr.mxu0 0.0
  %789 = vmatpush1.msra.mxu0 0.0
  %790 = vmatprep.subr.mxu0 0.0
  %791 = vmatpush1.msra.mxu0 0.0
  %792 = vmatprep.subr.mxu0 0.0
  %793 = vmatpush1.msra.mxu0 0.0
  %794 = vmatprep.subr.mxu0 0.0
  %795 = vmatpush1.msra.mxu0 0.0
  %796 = vmatprep.mubr.f32.mxu0 0.0
  %797 = vmatmul.mubr.f32.gmra.mrb[0].mxu0 %v730
  %v798 = vpop.f32.mrb[0].mxu0
  %v799 = vadd.f32 0.0, %v798
  %v800 = vpop.f32.mrb[0].mxu0
  %801 = vdwg.mxu0
  %v802 = vadd.f32 %v726, %v799
  %v803 = vxor.u32 %v802, 2147483648
  %v804 = vmul.f32 %v803, 1.442695
  %v805 = vpow.pop %v804
  %v806 = vadd.f32 %v805, 1.0
  %v807 = vrcp.pop %v806
  %v808 = vmul.f32 1.0, %v807
  %v809 = vtanh.pop %v802
  %v810 = vmul.f32 %v808, %v718
  %812 = vrot.lane.b32.xlu0 %v809, 64
  %v813 = vpop.permute.xlu0 %812
  %v815 = vmul.f32 %v808, %v813
  %817 = vrot.lane.b32.xlu0 %v815, 32
  %v818 = vpop.permute.xlu0 %817
  %v820 = vadd.f32 %v810, %v818
  %v821 = vtanh.pop %v820
  %823 = vrot.lane.b32.xlu0 %v821, 64
  %v824 = vpop.permute.xlu0 %823
  %v826 = vmul.f32 %v808, %v824
  %s827 = scalar_lea.vmem [#allocation2], 56
  %v828 = vld [vmem:[%s827] sm:$0xff]
  %830 = vrot.lane.b32.xlu0 %v826, 32
  %v831 = vpop.permute.xlu0 %830
  %v832 = vsel %vm116, %v831, 0
  %834 = vmatprep.subr.mxu0 0.0
  %835 = vmatpush1.msra.mxu0 %v111
  %836 = vmatprep.subr.mxu0 0.0
  %837 = vmatpush1.msra.mxu0 %v112
  %838 = vmatprep.subr.mxu0 0.0
  %839 = vmatpush1.msra.mxu0 %v113
  %840 = vmatprep.subr.mxu0 0.0
  %841 = vmatpush1.msra.mxu0 %v114
  %842 = vmatprep.subr.mxu0 0.0
  %843 = vmatpush1.msra.mxu0 0.0
  %844 = vmatprep.subr.mxu0 0.0
  %845 = vmatpush1.msra.mxu0 0.0
  %846 = vmatprep.subr.mxu0 0.0
  %847 = vmatpush1.msra.mxu0 0.0
  %848 = vmatprep.subr.mxu0 0.0
  %849 = vmatpush1.msra.mxu0 0.0
  %850 = vmatprep.subr.mxu0 0.0
  %851 = vmatpush1.msra.mxu0 0.0
  %852 = vmatprep.subr.mxu0 0.0
  %853 = vmatpush1.msra.mxu0 0.0
  %854 = vmatprep.subr.mxu0 0.0
  %855 = vmatpush1.msra.mxu0 0.0
  %856 = vmatprep.subr.mxu0 0.0
  %857 = vmatpush1.msra.mxu0 0.0
  %858 = vmatprep.subr.mxu0 0.0
  %859 = vmatpush1.msra.mxu0 0.0
  %860 = vmatprep.subr.mxu0 0.0
  %861 = vmatpush1.msra.mxu0 0.0
  %862 = vmatprep.subr.mxu0 0.0
  %863 = vmatpush1.msra.mxu0 0.0
  %864 = vmatprep.subr.mxu0 0.0
  %865 = vmatpush1.msra.mxu0 0.0
  %866 = vmatprep.subr.mxu0 0.0
  %867 = vmatpush1.msra.mxu0 0.0
  %868 = vmatprep.subr.mxu0 0.0
  %869 = vmatpush1.msra.mxu0 0.0
  %870 = vmatprep.subr.mxu0 0.0
  %871 = vmatpush1.msra.mxu0 0.0
  %872 = vmatprep.subr.mxu0 0.0
  %873 = vmatpush1.msra.mxu0 0.0
  %874 = vmatprep.subr.mxu0 0.0
  %875 = vmatpush1.msra.mxu0 0.0
  %876 = vmatprep.subr.mxu0 0.0
  %877 = vmatpush1.msra.mxu0 0.0
  %878 = vmatprep.subr.mxu0 0.0
  %879 = vmatpush1.msra.mxu0 0.0
  %880 = vmatprep.subr.mxu0 0.0
  %881 = vmatpush1.msra.mxu0 0.0
  %882 = vmatprep.subr.mxu0 0.0
  %883 = vmatpush1.msra.mxu0 0.0
  %884 = vmatprep.subr.mxu0 0.0
  %885 = vmatpush1.msra.mxu0 0.0
  %886 = vmatprep.subr.mxu0 0.0
  %887 = vmatpush1.msra.mxu0 0.0
  %888 = vmatprep.subr.mxu0 0.0
  %889 = vmatpush1.msra.mxu0 0.0
  %890 = vmatprep.subr.mxu0 0.0
  %891 = vmatpush1.msra.mxu0 0.0
  %892 = vmatprep.subr.mxu0 0.0
  %893 = vmatpush1.msra.mxu0 0.0
  %894 = vmatprep.subr.mxu0 0.0
  %895 = vmatpush1.msra.mxu0 0.0
  %896 = vmatprep.subr.mxu0 0.0
  %897 = vmatpush1.msra.mxu0 0.0
  %898 = vmatprep.mubr.f32.mxu0 0.0
  %899 = vmatmul.mubr.f32.gmra.mrb[0].mxu0 %v832
  %v900 = vpop.f32.mrb[0].mxu0
  %v901 = vadd.f32 0.0, %v900
  %v902 = vpop.f32.mrb[0].mxu0
  %903 = vdwg.mxu0
  %v904 = vadd.f32 %v828, %v901
  %v905 = vxor.u32 %v904, 2147483648
  %v906 = vmul.f32 %v905, 1.442695
  %v907 = vpow.pop %v906
  %v908 = vadd.f32 %v907, 1.0
  %v909 = vrcp.pop %v908
  %v910 = vmul.f32 1.0, %v909
  %v911 = vtanh.pop %v904
  %v912 = vmul.f32 %v910, %v820
  %914 = vrot.lane.b32.xlu0 %v911, 64
  %v915 = vpop.permute.xlu0 %914
  %v917 = vmul.f32 %v910, %v915
  %919 = vrot.lane.b32.xlu0 %v917, 32
  %v920 = vpop.permute.xlu0 %919
  %v922 = vadd.f32 %v912, %v920
  %v923 = vtanh.pop %v922
  %925 = vrot.lane.b32.xlu0 %v923, 64
  %v926 = vpop.permute.xlu0 %925
  %v928 = vmul.f32 %v910, %v926
  %v929 = vld [vmem:[%s4] sm:$0xff]
  %v930 = vld [vmem:[%s4 + $0x8] sm:$0xff]
  %v931 = vld [vmem:[%s4 + $0x10] sm:$0xff]
  %v932 = vld [vmem:[%s4 + $0x18] sm:$0xff]
  %v933 = vld [vmem:[#allocation3] sm:$0x1]
  %v935 = vlaneseq
  %v936 = vshrl.u32 %v935, 7
  %v937 = vsub.s32 0, %v936
  %v938 = vrot.slane %v933, %v937
  %941 = vrot.lane.b32.xlu0 %v928, 32
  %v942 = vpop.permute.xlu0 %941
  %v943 = vsel %vm116, %v942, 0
  %945 = vmatprep.subr.mxu0 0.0
  %946 = vmatpush1.msra.mxu0 %v929
  %947 = vmatprep.subr.mxu0 0.0
  %948 = vmatpush1.msra.mxu0 %v930
  %949 = vmatprep.subr.mxu0 0.0
  %950 = vmatpush1.msra.mxu0 %v931
  %951 = vmatprep.subr.mxu0 0.0
  %952 = vmatpush1.msra.mxu0 %v932
  %953 = vmatprep.subr.mxu0 0.0
  %954 = vmatpush1.msra.mxu0 0.0
  %955 = vmatprep.subr.mxu0 0.0
  %956 = vmatpush1.msra.mxu0 0.0
  %957 = vmatprep.subr.mxu0 0.0
  %958 = vmatpush1.msra.mxu0 0.0
  %959 = vmatprep.subr.mxu0 0.0
  %960 = vmatpush1.msra.mxu0 0.0
  %961 = vmatprep.subr.mxu0 0.0
  %962 = vmatpush1.msra.mxu0 0.0
  %963 = vmatprep.subr.mxu0 0.0
  %964 = vmatpush1.msra.mxu0 0.0
  %965 = vmatprep.subr.mxu0 0.0
  %966 = vmatpush1.msra.mxu0 0.0
  %967 = vmatprep.subr.mxu0 0.0
  %968 = vmatpush1.msra.mxu0 0.0
  %969 = vmatprep.subr.mxu0 0.0
  %970 = vmatpush1.msra.mxu0 0.0
  %971 = vmatprep.subr.mxu0 0.0
  %972 = vmatpush1.msra.mxu0 0.0
  %973 = vmatprep.subr.mxu0 0.0
  %974 = vmatpush1.msra.mxu0 0.0
  %975 = vmatprep.subr.mxu0 0.0
  %976 = vmatpush1.msra.mxu0 0.0
  %977 = vmatprep.subr.mxu0 0.0
  %978 = vmatpush1.msra.mxu0 0.0
  %979 = vmatprep.subr.mxu0 0.0
  %980 = vmatpush1.msra.mxu0 0.0
  %981 = vmatprep.subr.mxu0 0.0
  %982 = vmatpush1.msra.mxu0 0.0
  %983 = vmatprep.subr.mxu0 0.0
  %984 = vmatpush1.msra.mxu0 0.0
  %985 = vmatprep.subr.mxu0 0.0
  %986 = vmatpush1.msra.mxu0 0.0
  %987 = vmatprep.subr.mxu0 0.0
  %988 = vmatpush1.msra.mxu0 0.0
  %989 = vmatprep.subr.mxu0 0.0
  %990 = vmatpush1.msra.mxu0 0.0
  %991 = vmatprep.subr.mxu0 0.0
  %992 = vmatpush1.msra.mxu0 0.0
  %993 = vmatprep.subr.mxu0 0.0
  %994 = vmatpush1.msra.mxu0 0.0
  %995 = vmatprep.subr.mxu0 0.0
  %996 = vmatpush1.msra.mxu0 0.0
  %997 = vmatprep.subr.mxu0 0.0
  %998 = vmatpush1.msra.mxu0 0.0
  %999 = vmatprep.subr.mxu0 0.0
  %1000 = vmatpush1.msra.mxu0 0.0
  %1001 = vmatprep.subr.mxu0 0.0
  %1002 = vmatpush1.msra.mxu0 0.0
  %1003 = vmatprep.subr.mxu0 0.0
  %1004 = vmatpush1.msra.mxu0 0.0
  %1005 = vmatprep.subr.mxu0 0.0
  %1006 = vmatpush1.msra.mxu0 0.0
  %1007 = vmatprep.subr.mxu0 0.0
  %1008 = vmatpush1.msra.mxu0 0.0
  %1009 = vmatprep.mubr.f32.mxu0 0.0
  %1010 = vmatmul.mubr.f32.gmra.mrb[0].mxu0 %v943
  %v1011 = vpop.f32.mrb[0].mxu0
  %v1012 = vadd.f32 %v938, %v1011
  %v1013 = vpop.f32.mrb[0].mxu0
  %1014 = vdwg.mxu0
  %vm1015 = vcmask 7168
  %1016 = vst.msk [vmem:[%s6] sm:$0xff] %vm1015, %v1012
  // Predicated region
  $region26: #{_lstm_model_forward.1} parent=0 // pred_check
    _
  $region27: #{_lstm_model_forward.1} parent=0 // pred_check_branch
    %1018 = sbr.rel (0) target = $region29
  $region28: #{_lstm_model_forward.1} parent=0 // pred_region
    _
  $region29: #{_lstm_model_forward.1} parent=0 // pred_fallthru
    _
  // Predicated region
  $region30: #{_lstm_model_forward.1} parent=0 // pred_check
    _
  $region31: #{_lstm_model_forward.1} parent=0 // pred_check_branch
    %1020 = sbr.rel (0) target = $region33
  $region32: #{_lstm_model_forward.1} parent=0 // pred_region
    _
  $region33: #{_lstm_model_forward.1} parent=0 // pred_fallthru
    _

</llo_original>
